<compile_context>
chip_gen: v5e
topology: v5e:2x2
jax: 0.10.0
libtpu: 0.0.40
codegen_flags: <defaults>
</compile_context>

<pallas_src>
import jax
import jax.numpy as jnp
from jax import lax
from jax.experimental import pallas as pl
from jax.experimental.pallas import tpu as pltpu


def encoder_kernel(x_ref, w1t_ref, b1_ref, w2t_ref, b2_ref, w3_ref, b3_ref, o_ref):
    # x_ref: (tile, nin) f32 in natural layout; cast to bf16 in-kernel (VPU),
    # no separate wrapper-side cast/transpose pass over HBM.
    xb = x_ref[...].astype(jnp.bfloat16)

    # fc1 + ReLU: contract the feature axes -> transposed activations (64, tile)
    h = lax.dot_general(w1t_ref[...], xb,
                        dimension_numbers=(((1,), (1,)), ((), ())),
                        preferred_element_type=jnp.float32)
    h = jnp.maximum(h + b1_ref[...], 0.0)                       # (64,1) lane-bcast

    # fc2 + ReLU: (64, 64) @ (64, tile) -> (64, tile)
    h = jnp.dot(w2t_ref[...], h.astype(jnp.bfloat16),
                preferred_element_type=jnp.float32)
    h = jnp.maximum(h + b2_ref[...], 0.0)

    # fc3 + tanh in natural output orientation: contract h dim0 with w3 dim0
    # -> (tile, emb).  No wrapper-side output transpose needed.
    out = lax.dot_general(h.astype(jnp.bfloat16), w3_ref[...],
                          dimension_numbers=(((0,), (0,)), ((), ())),
                          preferred_element_type=jnp.float32)
    o_ref[...] = jnp.tanh(out + b3_ref[...]).astype(o_ref.dtype)


def _num_tensorcores_per_chip():
    """Best-effort TC-per-chip count (2 on v7x, 1 on v5e/v6e)."""
    try:
        d = jax.devices()[0]
        cores = getattr(d, "num_cores", None)
        if isinstance(cores, int) and cores > 0:
            return cores
        if "v7" in str(getattr(d, "device_kind", "")).lower():
            return 2
    except Exception:
        pass
    return 1


def _choose_tile(batch, batch_tile, ntc):
    bp128 = pl.cdiv(batch, 128) * 128
    tile = max(128, (min(batch_tile, bp128) // 128) * 128)
    grid_n = pl.cdiv(batch, tile)
    # v7x (2 TCs): prefer an even number of grid steps so both cores get
    # balanced shards of the "parallel" batch axis.  On 1-TC chips keep the
    # largest tile (an extra grid step is pure overhead there).
    if ntc >= 2 and grid_n % 2 == 1 and tile >= 256:
        tile = max(128, ((tile // 2) // 128) * 128)
        grid_n = pl.cdiv(batch, tile)
    return tile, grid_n


def _encoder_xla(x, prepped):
    """Plain-XLA fallback for small batches (same math as the kernel)."""
    w1t, b1c, w2t, b2c, w3n, b3r = prepped
    xb = x.astype(jnp.bfloat16)
    h = lax.dot_general(xb, w1t, (((1,), (1,)), ((), ())),
                        preferred_element_type=jnp.float32)
    h = jnp.maximum(h + b1c.T, 0.0)
    h = lax.dot_general(h.astype(jnp.bfloat16), w2t, (((1,), (1,)), ((), ())),
                        preferred_element_type=jnp.float32)
    h = jnp.maximum(h + b2c.T, 0.0)
    out = jnp.dot(h.astype(jnp.bfloat16), w3n, preferred_element_type=jnp.float32)
    return jnp.tanh(out + b3r)


def encoder_forward(x, prepped, *, batch_tile=1024):
    """x: (B, num_input_feat) f32, prepped = prepare_params(params) -> (B, emb) f32."""
    w1t, b1c, w2t, b2c, w3n, b3r = prepped
    batch, nin = x.shape
    emb_dim = w3n.shape[1]

    # Small-batch fallback: dispatch-overhead dominated, padding to 128 lanes
    # would compute up to 16x garbage rows.  Plain XLA is faster there.
    if batch < 128:
        return _encoder_xla(x, prepped)

    ntc = _num_tensorcores_per_chip()
    tile, grid_n = _choose_tile(batch, batch_tile, ntc)
    bp = grid_n * tile

    xp = x if bp == batch else jnp.pad(x, ((0, bp - batch), (0, 0)))

    def rep2(a):  # tiny weight/bias blocks, constant index map -> DMA'd once
        return pl.BlockSpec(a.shape, lambda i: (0, 0))

    out = pl.pallas_call(
        encoder_kernel,
        out_shape=jax.ShapeDtypeStruct((bp, emb_dim), jnp.float32),
        grid_spec=pl.GridSpec(
            grid=(grid_n,),
            in_specs=[
                pl.BlockSpec((tile, nin), lambda i: (i, 0)),     # x tile (natural)
                rep2(w1t), rep2(b1c),
                rep2(w2t), rep2(b2c),
                rep2(w3n), rep2(b3r),
            ],
            out_specs=pl.BlockSpec((tile, emb_dim), lambda i: (i, 0)),
        ),
        compiler_params=pltpu.CompilerParams(
            dimension_semantics=("parallel",),
        ),
    )(xp, w1t, b1c, w2t, b2c, w3n, b3r)

    return out if bp == batch else out[:batch]


def init_params(key, num_input_feat, emb_dim):
    """Deterministic init matching nn.Linear shapes (weights stored as (in, out))."""
    ks = jax.random.split(key, 6)

    def linear(kw, kb, fan_in, fan_out):
        bound = 1.0 / jnp.sqrt(fan_in)
        w = jax.random.uniform(kw, (fan_in, fan_out), jnp.float32, -bound, bound)
        b = jax.random.uniform(kb, (1, fan_out), jnp.float32, -bound, bound)
        return w, b

    w1, b1 = linear(ks[0], ks[1], num_input_feat, 64)
    w2, b2 = linear(ks[2], ks[3], 64, 64)
    w3, b3 = linear(ks[4], ks[5], 64, emb_dim)
    return (w1, b1, w2, b2, w3, b3)


def prepare_params(params):
    """One-time layout/dtype prep (kept OUT of the per-call forward path)."""
    w1, b1, w2, b2, w3, b3 = params
    return (
        w1.T.astype(jnp.bfloat16),            # (64, nin)
        b1.reshape(-1, 1).astype(jnp.float32),  # (64, 1)  column (lane-broadcast)
        w2.T.astype(jnp.bfloat16),            # (64, 64)
        b2.reshape(-1, 1).astype(jnp.float32),  # (64, 1)
        w3.astype(jnp.bfloat16),              # (64, emb) natural (layer-3 output natural)
        b3.reshape(1, -1).astype(jnp.float32),  # (1, emb)  row (sublane-broadcast)
    )


def encoder_ref(x, params):
    """Pure-f32 reference (matches the PyTorch module semantics)."""
    w1, b1, w2, b2, w3, b3 = params
    h = jnp.maximum(x @ w1 + b1, 0.0)
    h = jnp.maximum(h @ w2 + b2, 0.0)
    return jnp.tanh(h @ w3 + b3)


if __name__ == "__main__":
    num_input_feat = 32
    emb_dim = 32
    batch = 256          # >= 128 so the Pallas path (not the XLA fallback) runs

    key = jax.random.PRNGKey(0)
    kx, kp = jax.random.split(key)
    x = jax.random.normal(kx, (batch, num_input_feat), jnp.float32)
    params = init_params(kp, num_input_feat, emb_dim)
    prepped = prepare_params(params)       # one-time weight prep, outside forward

    fwd = jax.jit(encoder_forward)
    out = jax.block_until_ready(fwd(x, prepped))
    ref = encoder_ref(x, params)
    assert out.shape == (batch, emb_dim)
    # bf16 matmul inputs (f32 accumulation) -> relaxed tolerance vs f32 reference.
    assert jnp.allclose(out, ref, atol=5e-2, rtol=5e-2)

    # Small-batch path (plain-XLA fallback) keeps the same semantics.
    xs = jax.random.normal(kx, (8, num_input_feat), jnp.float32)
    outs = jax.block_until_ready(fwd(xs, prepped))
    refs = encoder_ref(xs, params)
    assert outs.shape == (8, emb_dim)
    assert jnp.allclose(outs, refs, atol=5e-2, rtol=5e-2)

    print("KERNEL_OK")
</pallas_src>

<mosaic_0001>
module attributes {stable_mosaic.version = 11 : i64} {
  func.func @encoder_kernel(%arg0: i32, %arg1: memref<256x32xf32, #tpu.memory_space<vmem>>, %arg2: memref<64x32xbf16, #tpu.memory_space<vmem>>, %arg3: memref<64x1xf32, #tpu.memory_space<vmem>>, %arg4: memref<64x64xbf16, #tpu.memory_space<vmem>>, %arg5: memref<64x1xf32, #tpu.memory_space<vmem>>, %arg6: memref<64x32xbf16, #tpu.memory_space<vmem>>, %arg7: memref<1x32xf32, #tpu.memory_space<vmem>>, %arg8: memref<256x32xf32, #tpu.memory_space<vmem>>) attributes {dimension_semantics = [#tpu.dimension_semantics<parallel>], iteration_bounds = array<i64: 1>, scalar_prefetch = 0 : i64, scratch_operands = 0 : i64, tpu.core_type = #tpu.core_type<tc>, window_params = [{transform_indices = @transform_0, window_bounds = array<i64: 256, 32>}, {pipeline_mode = #tpu.pipeline_mode<synchronous>, transform_indices = @transform_1, window_bounds = array<i64: 64, 32>}, {pipeline_mode = #tpu.pipeline_mode<synchronous>, transform_indices = @transform_2, window_bounds = array<i64: 64, 1>}, {pipeline_mode = #tpu.pipeline_mode<synchronous>, transform_indices = @transform_3, window_bounds = array<i64: 64, 64>}, {pipeline_mode = #tpu.pipeline_mode<synchronous>, transform_indices = @transform_4, window_bounds = array<i64: 64, 1>}, {pipeline_mode = #tpu.pipeline_mode<synchronous>, transform_indices = @transform_5, window_bounds = array<i64: 64, 32>}, {pipeline_mode = #tpu.pipeline_mode<synchronous>, transform_indices = @transform_6, window_bounds = array<i64: 1, 32>}, {transform_indices = @transform_7, window_bounds = array<i64: 256, 32>}]} {
    %c0 = arith.constant 0 : index
    %c0_0 = arith.constant 0 : index
    %0 = vector.load %arg1[%c0, %c0_0] : memref<256x32xf32, #tpu.memory_space<vmem>>, vector<256x32xf32>
    %1 = arith.truncf %0 : vector<256x32xf32> to vector<256x32xbf16>
    %c0_1 = arith.constant 0 : index
    %c0_2 = arith.constant 0 : index
    %2 = vector.load %arg2[%c0_1, %c0_2] : memref<64x32xbf16, #tpu.memory_space<vmem>>, vector<64x32xbf16>
    %cst = arith.constant dense<0.000000e+00> : vector<64x256xf32>
    %3 = tpu.matmul %2, %1, %cst {dimension_numbers = #tpu.dot_dimension_numbers<[1], [1], [0], [0], [0, 0, 1, 0], [], []>} : vector<64x32xbf16>, vector<256x32xbf16>, vector<64x256xf32> -> vector<64x256xf32>
    %c0_3 = arith.constant 0 : index
    %c0_4 = arith.constant 0 : index
    %4 = vector.load %arg3[%c0_3, %c0_4] : memref<64x1xf32, #tpu.memory_space<vmem>>, vector<64x1xf32>
    %5 = vector.broadcast %4 : vector<64x1xf32> to vector<64x256xf32>
    %6 = arith.addf %3, %5 : vector<64x256xf32>
    %cst_5 = arith.constant 0.000000e+00 : f32
    %7 = vector.broadcast %cst_5 : f32 to vector<64x256xf32>
    %8 = arith.maximumf %6, %7 : vector<64x256xf32>
    %c0_6 = arith.constant 0 : index
    %c0_7 = arith.constant 0 : index
    %9 = vector.load %arg4[%c0_6, %c0_7] : memref<64x64xbf16, #tpu.memory_space<vmem>>, vector<64x64xbf16>
    %10 = arith.truncf %8 : vector<64x256xf32> to vector<64x256xbf16>
    %cst_8 = arith.constant dense<0.000000e+00> : vector<64x256xf32>
    %11 = tpu.matmul %9, %10, %cst_8 {dimension_numbers = #tpu.dot_dimension_numbers<[1], [0], [0], [1], [0, 0, 1, 1], [], []>} : vector<64x64xbf16>, vector<64x256xbf16>, vector<64x256xf32> -> vector<64x256xf32>
    %c0_9 = arith.constant 0 : index
    %c0_10 = arith.constant 0 : index
    %12 = vector.load %arg5[%c0_9, %c0_10] : memref<64x1xf32, #tpu.memory_space<vmem>>, vector<64x1xf32>
    %13 = vector.broadcast %12 : vector<64x1xf32> to vector<64x256xf32>
    %14 = arith.addf %11, %13 : vector<64x256xf32>
    %cst_11 = arith.constant 0.000000e+00 : f32
    %15 = vector.broadcast %cst_11 : f32 to vector<64x256xf32>
    %16 = arith.maximumf %14, %15 : vector<64x256xf32>
    %17 = arith.truncf %16 : vector<64x256xf32> to vector<64x256xbf16>
    %c0_12 = arith.constant 0 : index
    %c0_13 = arith.constant 0 : index
    %18 = vector.load %arg6[%c0_12, %c0_13] : memref<64x32xbf16, #tpu.memory_space<vmem>>, vector<64x32xbf16>
    %cst_14 = arith.constant dense<0.000000e+00> : vector<256x32xf32>
    %19 = tpu.matmul %17, %18, %cst_14 {dimension_numbers = #tpu.dot_dimension_numbers<[0], [0], [1], [1], [0, 1, 1, 1], [], []>} : vector<64x256xbf16>, vector<64x32xbf16>, vector<256x32xf32> -> vector<256x32xf32>
    %c0_15 = arith.constant 0 : index
    %c0_16 = arith.constant 0 : index
    %20 = vector.load %arg7[%c0_15, %c0_16] : memref<1x32xf32, #tpu.memory_space<vmem>>, vector<1x32xf32>
    %21 = vector.broadcast %20 : vector<1x32xf32> to vector<256x32xf32>
    %22 = arith.addf %19, %21 : vector<256x32xf32>
    %23 = math.tanh %22 : vector<256x32xf32>
    %c0_17 = arith.constant 0 : index
    %c0_18 = arith.constant 0 : index
    %24 = vector.load %arg8[%c0_17, %c0_18] : memref<256x32xf32, #tpu.memory_space<vmem>>, vector<256x32xf32>
    tpu.vector_store %arg8[%c0_17, %c0_18], %23 {strides = array<i32>} : memref<256x32xf32, #tpu.memory_space<vmem>>, vector<256x32xf32>,
    return
  }
  func.func @transform_0(%arg0: i32) -> (i32, i32) {
    %c0_i32 = arith.constant 0 : i32
    %c0_i32_0 = arith.constant 0 : i32
    return %arg0, %c0_i32 : i32, i32
  }
  func.func @transform_1(%arg0: i32) -> (i32, i32) {
    %c0_i32 = arith.constant 0 : i32
    %c0_i32_0 = arith.constant 0 : i32
    %c0_i32_1 = arith.constant 0 : i32
    return %c0_i32, %c0_i32_0 : i32, i32
  }
  func.func @transform_2(%arg0: i32) -> (i32, i32) {
    %c0_i32 = arith.constant 0 : i32
    %c0_i32_0 = arith.constant 0 : i32
    %c0_i32_1 = arith.constant 0 : i32
    return %c0_i32, %c0_i32_0 : i32, i32
  }
  func.func @transform_3(%arg0: i32) -> (i32, i32) {
    %c0_i32 = arith.constant 0 : i32
    %c0_i32_0 = arith.constant 0 : i32
    %c0_i32_1 = arith.constant 0 : i32
    return %c0_i32, %c0_i32_0 : i32, i32
  }
  func.func @transform_4(%arg0: i32) -> (i32, i32) {
    %c0_i32 = arith.constant 0 : i32
    %c0_i32_0 = arith.constant 0 : i32
    %c0_i32_1 = arith.constant 0 : i32
    return %c0_i32, %c0_i32_0 : i32, i32
  }
  func.func @transform_5(%arg0: i32) -> (i32, i32) {
    %c0_i32 = arith.constant 0 : i32
    %c0_i32_0 = arith.constant 0 : i32
    %c0_i32_1 = arith.constant 0 : i32
    return %c0_i32, %c0_i32_0 : i32, i32
  }
  func.func @transform_6(%arg0: i32) -> (i32, i32) {
    %c0_i32 = arith.constant 0 : i32
    %c0_i32_0 = arith.constant 0 : i32
    %c0_i32_1 = arith.constant 0 : i32
    return %c0_i32, %c0_i32_0 : i32, i32
  }
  func.func @transform_7(%arg0: i32) -> (i32, i32) {
    %c0_i32 = arith.constant 0 : i32
    %c0_i32_0 = arith.constant 0 : i32
    return %arg0, %c0_i32 : i32, i32
  }
}

</mosaic_0001>

<llo_original>
// kernel: encoder_forward.1
$region0: #{encoder_forward.1}
  #allocation0 [shape = 'u32[]', space=smem, size = 0x4, offset = 0x4, fixed_abs, tag = 'smem constant byte address 0x4 - core index']
  #allocation1 [shape = 'u32[72,128]{1,0:T(1,128)}', space=vmem, size = 0x9000, scoped, tag = 'internal scratch']
  %s0 = inlined_call_operand.vmem [shape: f32[256,32], index: 0, kind: input, shape index: {}]
  %s1 = inlined_call_operand.vmem [shape: bf16[64,32], index: 1, kind: input, shape index: {}]
  %s2 = inlined_call_operand.vmem [shape: f32[64,1], index: 2, kind: input, shape index: {}]
  %s3 = inlined_call_operand.vmem [shape: bf16[64,64], index: 3, kind: input, shape index: {}]
  %s4 = inlined_call_operand.vmem [shape: f32[64,1], index: 4, kind: input, shape index: {}]
  %s5 = inlined_call_operand.vmem [shape: bf16[64,32], index: 5, kind: input, shape index: {}]
  %s6 = inlined_call_operand.vmem [shape: f32[1,32], index: 6, kind: input, shape index: {}]
  %s7 = inlined_call_operand.vmem [shape: f32[256,32], index: 7, kind: output, shape index: {}]
  %s8 = sld [smem:[#allocation0]]
  $region38: #{encoder_forward.1} parent=0
    _
  %s10 = ssub.s32 1, %s8
  %s11 = scalar_select 0, %s10, %s8
  // Predicated region
  $region2: #{encoder_forward.1} parent=0 // pred_check
    _
  $region3: #{encoder_forward.1} parent=0 // pred_check_branch
    %13 = sbr.rel (0) target = $region5
  $region4: #{encoder_forward.1} parent=0 // pred_region
    _
  $region5: #{encoder_forward.1} parent=0 // pred_fallthru
    _
  // Predicated region
  $region6: #{encoder_forward.1} parent=0 // pred_check
    _
  $region7: #{encoder_forward.1} parent=0 // pred_check_branch
    %15 = sbr.rel (0) target = $region9
  $region8: #{encoder_forward.1} parent=0 // pred_region
    _
  $region9: #{encoder_forward.1} parent=0 // pred_fallthru
    _
  // Predicated region
  $region10: #{encoder_forward.1} parent=0 // pred_check
    _
  $region11: #{encoder_forward.1} parent=0 // pred_check_branch
    %17 = sbr.rel (0) target = $region13
  $region12: #{encoder_forward.1} parent=0 // pred_region
    _
  $region13: #{encoder_forward.1} parent=0 // pred_fallthru
    _
  // Predicated region
  $region14: #{encoder_forward.1} parent=0 // pred_check
    _
  $region15: #{encoder_forward.1} parent=0 // pred_check_branch
    %19 = sbr.rel (0) target = $region17
  $region16: #{encoder_forward.1} parent=0 // pred_region
    _
  $region17: #{encoder_forward.1} parent=0 // pred_fallthru
    _
  // Predicated region
  $region18: #{encoder_forward.1} parent=0 // pred_check
    _
  $region19: #{encoder_forward.1} parent=0 // pred_check_branch
    %21 = sbr.rel (0) target = $region21
  $region20: #{encoder_forward.1} parent=0 // pred_region
    _
  $region21: #{encoder_forward.1} parent=0 // pred_fallthru
    _
  // Predicated region
  $region22: #{encoder_forward.1} parent=0 // pred_check
    _
  $region23: #{encoder_forward.1} parent=0 // pred_check_branch
    %23 = sbr.rel (0) target = $region25
  $region24: #{encoder_forward.1} parent=0 // pred_region
    _
  $region25: #{encoder_forward.1} parent=0 // pred_fallthru
    _
  // Predicated region
  $region26: #{encoder_forward.1} parent=0 // pred_check
    _
  $region27: #{encoder_forward.1} parent=0 // pred_check_branch
    %25 = sbr.rel (0) target = $region29
  $region28: #{encoder_forward.1} parent=0 // pred_region
    _
  $region29: #{encoder_forward.1} parent=0 // pred_fallthru
    _
  %v27 = vld [vmem:[%s0] sm:$0xff]
  %v28 = vld [vmem:[%s0 + $0x8] sm:$0xff]
  %v29 = vld [vmem:[%s0 + $0x10] sm:$0xff]
  %v30 = vld [vmem:[%s0 + $0x18] sm:$0xff]
  %v31 = vld [vmem:[%s0 + $0x20] sm:$0xff]
  %v32 = vld [vmem:[%s0 + $0x28] sm:$0xff]
  %v33 = vld [vmem:[%s0 + $0x30] sm:$0xff]
  %v34 = vld [vmem:[%s0 + $0x38] sm:$0xff]
  %v35 = vld [vmem:[%s0 + $0x40] sm:$0xff]
  %v36 = vld [vmem:[%s0 + $0x48] sm:$0xff]
  %v37 = vld [vmem:[%s0 + $0x50] sm:$0xff]
  %v38 = vld [vmem:[%s0 + $0x58] sm:$0xff]
  %v39 = vld [vmem:[%s0 + $0x60] sm:$0xff]
  %v40 = vld [vmem:[%s0 + $0x68] sm:$0xff]
  %v41 = vld [vmem:[%s0 + $0x70] sm:$0xff]
  %v42 = vld [vmem:[%s0 + $0x78] sm:$0xff]
  %v43 = vld [vmem:[%s0 + $0x80] sm:$0xff]
  %v44 = vld [vmem:[%s0 + $0x88] sm:$0xff]
  %v45 = vld [vmem:[%s0 + $0x90] sm:$0xff]
  %v46 = vld [vmem:[%s0 + $0x98] sm:$0xff]
  %v47 = vld [vmem:[%s0 + $0xa0] sm:$0xff]
  %v48 = vld [vmem:[%s0 + $0xa8] sm:$0xff]
  %v49 = vld [vmem:[%s0 + $0xb0] sm:$0xff]
  %v50 = vld [vmem:[%s0 + $0xb8] sm:$0xff]
  %v51 = vld [vmem:[%s0 + $0xc0] sm:$0xff]
  %v52 = vld [vmem:[%s0 + $0xc8] sm:$0xff]
  %v53 = vld [vmem:[%s0 + $0xd0] sm:$0xff]
  %v54 = vld [vmem:[%s0 + $0xd8] sm:$0xff]
  %v55 = vld [vmem:[%s0 + $0xe0] sm:$0xff]
  %v56 = vld [vmem:[%s0 + $0xe8] sm:$0xff]
  %v57 = vld [vmem:[%s0 + $0xf0] sm:$0xff]
  %v58 = vld [vmem:[%s0 + $0xf8] sm:$0xff]
  %v59 = vpack.c.bf16 %v28, %v27
  %v60 = vpack.c.bf16 %v30, %v29
  %v61 = vpack.c.bf16 %v32, %v31
  %v62 = vpack.c.bf16 %v34, %v33
  %v63 = vpack.c.bf16 %v36, %v35
  %v64 = vpack.c.bf16 %v38, %v37
  %v65 = vpack.c.bf16 %v40, %v39
  %v66 = vpack.c.bf16 %v42, %v41
  %v67 = vpack.c.bf16 %v44, %v43
  %v68 = vpack.c.bf16 %v46, %v45
  %v69 = vpack.c.bf16 %v48, %v47
  %v70 = vpack.c.bf16 %v50, %v49
  %v71 = vpack.c.bf16 %v52, %v51
  %v72 = vpack.c.bf16 %v54, %v53
  %v73 = vpack.c.bf16 %v56, %v55
  %v74 = vpack.c.bf16 %v58, %v57
  %v75 = vld [vmem:[%s1] sm:$0xf]
  %v76 = vld [vmem:[%s1 + $0x4] sm:$0xf]
  %v77 = vld [vmem:[%s1 + $0x8] sm:$0xf]
  %v78 = vld [vmem:[%s1 + $0xc] sm:$0xf]
  %v79 = vld [vmem:[%s1 + $0x10] sm:$0xf]
  %v80 = vld [vmem:[%s1 + $0x14] sm:$0xf]
  %v81 = vld [vmem:[%s1 + $0x18] sm:$0xf]
  %v82 = vld [vmem:[%s1 + $0x1c] sm:$0xf]
  %v83 = vld [vmem:[%s2] sm:$0xff]
  %v84 = vld [vmem:[%s2 + $0x8] sm:$0xff]
  %v85 = vld [vmem:[%s2 + $0x10] sm:$0xff]
  %v86 = vld [vmem:[%s2 + $0x18] sm:$0xff]
  %v87 = vld [vmem:[%s2 + $0x20] sm:$0xff]
  %v88 = vld [vmem:[%s2 + $0x28] sm:$0xff]
  %v89 = vld [vmem:[%s2 + $0x30] sm:$0xff]
  %v90 = vld [vmem:[%s2 + $0x38] sm:$0xff]
  %92 = vset.pattern.permute.xlu0 0
  %93 = vperm.xlu0 %92, %v83
  %v94 = vpop.permute.xlu0 %93
  %97 = vset.pattern.permute.xlu0 0
  %98 = vperm.xlu0 %97, %v84
  %v99 = vpop.permute.xlu0 %98
  %102 = vset.pattern.permute.xlu0 0
  %103 = vperm.xlu0 %102, %v85
  %v104 = vpop.permute.xlu0 %103
  %107 = vset.pattern.permute.xlu0 0
  %108 = vperm.xlu0 %107, %v86
  %v109 = vpop.permute.xlu0 %108
  %112 = vset.pattern.permute.xlu0 0
  %113 = vperm.xlu0 %112, %v87
  %v114 = vpop.permute.xlu0 %113
  %117 = vset.pattern.permute.xlu0 0
  %118 = vperm.xlu0 %117, %v88
  %v119 = vpop.permute.xlu0 %118
  %122 = vset.pattern.permute.xlu0 0
  %123 = vperm.xlu0 %122, %v89
  %v124 = vpop.permute.xlu0 %123
  %127 = vset.pattern.permute.xlu0 0
  %128 = vperm.xlu0 %127, %v90
  %v129 = vpop.permute.xlu0 %128
  %v139 = vunpack.c.l.b16 %v75
  %v140 = vunpack.c.l.b16 %v76
  %v141 = vunpack.c.l.b16 %v77
  %v142 = vunpack.c.l.b16 %v78
  %v143 = vunpack.c.l.b16 %v79
  %v144 = vunpack.c.l.b16 %v80
  %v145 = vunpack.c.l.b16 %v81
  %v146 = vunpack.c.l.b16 %v82
  %v147 = vpack.c.b16 %v140, %v139
  %v148 = vpack.c.b16 %v142, %v141
  %v149 = vpack.c.b16 %v144, %v143
  %v150 = vpack.c.b16 %v146, %v145
  %vm151 = vcmask 261120
  %v153 = vsel %vm151, %v147, 0
  %v156 = vsel %vm151, %v148, 0
  %v159 = vsel %vm151, %v149, 0
  %v162 = vsel %vm151, %v150, 0
  %v165 = vsel %vm151, %v59, 0
  %v168 = vsel %vm151, %v60, 0
  %v171 = vsel %vm151, %v61, 0
  %v174 = vsel %vm151, %v62, 0
  %v177 = vsel %vm151, %v63, 0
  %v180 = vsel %vm151, %v64, 0
  %v183 = vsel %vm151, %v65, 0
  %v186 = vsel %vm151, %v66, 0
  %v189 = vsel %vm151, %v67, 0
  %v192 = vsel %vm151, %v68, 0
  %v195 = vsel %vm151, %v69, 0
  %v198 = vsel %vm151, %v70, 0
  %v201 = vsel %vm151, %v71, 0
  %v204 = vsel %vm151, %v72, 0
  %v207 = vsel %vm151, %v73, 0
  %v210 = vsel %vm151, %v74, 0
  %212 = vmatpush.bf16.xpose.msra.mxu0 %v186
  %213 = vmatpush.bf16.xpose.msra.mxu0 %v183
  %214 = vmatpush.bf16.xpose.msra.mxu0 %v180
  %215 = vmatpush.bf16.xpose.msra.mxu0 %v177
  %216 = vmatpush.bf16.xpose.msra.mxu0 %v174
  %217 = vmatpush.bf16.xpose.msra.mxu0 %v171
  %218 = vmatpush.bf16.xpose.msra.mxu0 %v168
  %219 = vmatpush.bf16.xpose.msra.mxu0 %v165
  %220 = vmatmul.bf16.gmra.mxu0 %v153
  %v221 = vpop.f32.mrf.mxu0
  %v222 = vadd.f32 %v94, %v221
  %v223 = vpop.f32.mrf.mxu0
  %v224 = vadd.f32 %v99, %v223
  %225 = vmatmul.bf16.gmra.mxu0 %v156
  %v226 = vpop.f32.mrf.mxu0
  %v227 = vadd.f32 %v104, %v226
  %v228 = vpop.f32.mrf.mxu0
  %v229 = vadd.f32 %v109, %v228
  %230 = vmatmul.bf16.gmra.mxu0 %v159
  %v231 = vpop.f32.mrf.mxu0
  %v232 = vadd.f32 %v114, %v231
  %v233 = vpop.f32.mrf.mxu0
  %v234 = vadd.f32 %v119, %v233
  %235 = vmatmul.bf16.gmra.mxu0 %v162
  %v236 = vpop.f32.mrf.mxu0
  %v237 = vadd.f32 %v124, %v236
  %v238 = vpop.f32.mrf.mxu0
  %v239 = vadd.f32 %v129, %v238
  %240 = vdwg.mxu0
  %241 = vmatpush.bf16.xpose.msra.mxu0 %v210
  %242 = vmatpush.bf16.xpose.msra.mxu0 %v207
  %243 = vmatpush.bf16.xpose.msra.mxu0 %v204
  %244 = vmatpush.bf16.xpose.msra.mxu0 %v201
  %245 = vmatpush.bf16.xpose.msra.mxu0 %v198
  %246 = vmatpush.bf16.xpose.msra.mxu0 %v195
  %247 = vmatpush.bf16.xpose.msra.mxu0 %v192
  %248 = vmatpush.bf16.xpose.msra.mxu0 %v189
  %249 = vmatmul.bf16.gmra.mxu0 %v153
  %v250 = vpop.f32.mrf.mxu0
  %v251 = vadd.f32 %v94, %v250
  %v252 = vpop.f32.mrf.mxu0
  %v253 = vadd.f32 %v99, %v252
  %254 = vmatmul.bf16.gmra.mxu0 %v156
  %v255 = vpop.f32.mrf.mxu0
  %v256 = vadd.f32 %v104, %v255
  %v257 = vpop.f32.mrf.mxu0
  %v258 = vadd.f32 %v109, %v257
  %259 = vmatmul.bf16.gmra.mxu0 %v159
  %v260 = vpop.f32.mrf.mxu0
  %v261 = vadd.f32 %v114, %v260
  %v262 = vpop.f32.mrf.mxu0
  %v263 = vadd.f32 %v119, %v262
  %264 = vmatmul.bf16.gmra.mxu0 %v162
  %v265 = vpop.f32.mrf.mxu0
  %v266 = vadd.f32 %v124, %v265
  %v267 = vpop.f32.mrf.mxu0
  %v268 = vadd.f32 %v129, %v267
  %269 = vdwg.mxu0
  %v270 = vmax.f32 %v222, 0.0
  %v271 = vmax.f32 %v251, 0.0
  %v272 = vmax.f32 %v224, 0.0
  %v273 = vmax.f32 %v253, 0.0
  %v274 = vmax.f32 %v227, 0.0
  %v275 = vmax.f32 %v256, 0.0
  %v276 = vmax.f32 %v229, 0.0
  %v277 = vmax.f32 %v258, 0.0
  %v278 = vmax.f32 %v232, 0.0
  %v279 = vmax.f32 %v261, 0.0
  %v280 = vmax.f32 %v234, 0.0
  %v281 = vmax.f32 %v263, 0.0
  %v282 = vmax.f32 %v237, 0.0
  %v283 = vmax.f32 %v266, 0.0
  %v284 = vmax.f32 %v239, 0.0
  %v285 = vmax.f32 %v268, 0.0
  %v286 = vld [vmem:[%s3] sm:$0xf]
  %v287 = vld [vmem:[%s3 + $0x4] sm:$0xf]
  %v288 = vld [vmem:[%s3 + $0x8] sm:$0xf]
  %v289 = vld [vmem:[%s3 + $0xc] sm:$0xf]
  %v290 = vld [vmem:[%s3 + $0x10] sm:$0xf]
  %v291 = vld [vmem:[%s3 + $0x14] sm:$0xf]
  %v292 = vld [vmem:[%s3 + $0x18] sm:$0xf]
  %v293 = vld [vmem:[%s3 + $0x1c] sm:$0xf]
  %v294 = vpack.c.bf16 %v272, %v270
  %v295 = vpack.c.bf16 %v273, %v271
  %v296 = vpack.c.bf16 %v276, %v274
  %v297 = vpack.c.bf16 %v277, %v275
  %v298 = vpack.c.bf16 %v280, %v278
  %v299 = vpack.c.bf16 %v281, %v279
  %v300 = vpack.c.bf16 %v284, %v282
  %v301 = vpack.c.bf16 %v285, %v283
  %v302 = vld [vmem:[%s4] sm:$0xff]
  %v303 = vld [vmem:[%s4 + $0x8] sm:$0xff]
  %v304 = vld [vmem:[%s4 + $0x10] sm:$0xff]
  %v305 = vld [vmem:[%s4 + $0x18] sm:$0xff]
  %v306 = vld [vmem:[%s4 + $0x20] sm:$0xff]
  %v307 = vld [vmem:[%s4 + $0x28] sm:$0xff]
  %v308 = vld [vmem:[%s4 + $0x30] sm:$0xff]
  %v309 = vld [vmem:[%s4 + $0x38] sm:$0xff]
  %311 = vset.pattern.permute.xlu0 0
  %312 = vperm.xlu0 %311, %v302
  %v313 = vpop.permute.xlu0 %312
  %316 = vset.pattern.permute.xlu0 0
  %317 = vperm.xlu0 %316, %v303
  %v318 = vpop.permute.xlu0 %317
  %321 = vset.pattern.permute.xlu0 0
  %322 = vperm.xlu0 %321, %v304
  %v323 = vpop.permute.xlu0 %322
  %326 = vset.pattern.permute.xlu0 0
  %327 = vperm.xlu0 %326, %v305
  %v328 = vpop.permute.xlu0 %327
  %331 = vset.pattern.permute.xlu0 0
  %332 = vperm.xlu0 %331, %v306
  %v333 = vpop.permute.xlu0 %332
  %336 = vset.pattern.permute.xlu0 0
  %337 = vperm.xlu0 %336, %v307
  %v338 = vpop.permute.xlu0 %337
  %341 = vset.pattern.permute.xlu0 0
  %342 = vperm.xlu0 %341, %v308
  %v343 = vpop.permute.xlu0 %342
  %346 = vset.pattern.permute.xlu0 0
  %347 = vperm.xlu0 %346, %v309
  %v348 = vpop.permute.xlu0 %347
  %v358 = vunpack.c.l.b16 %v286
  %v359 = vunpack.c.l.b16 %v287
  %v360 = vunpack.c.l.b16 %v288
  %v361 = vunpack.c.l.b16 %v289
  %v362 = vunpack.c.l.b16 %v290
  %v363 = vunpack.c.l.b16 %v291
  %v364 = vunpack.c.l.b16 %v292
  %v365 = vunpack.c.l.b16 %v293
  %v366 = vpack.c.b16 %v359, %v358
  %v367 = vpack.c.b16 %v361, %v360
  %v368 = vpack.c.b16 %v363, %v362
  %v369 = vpack.c.b16 %v365, %v364
  %vm370 = vcmask 523264
  %v372 = vsel %vm370, %v366, 0
  %v375 = vsel %vm370, %v367, 0
  %v378 = vsel %vm370, %v368, 0
  %v381 = vsel %vm370, %v369, 0
  %383 = vmatpush.bf16.msra.mxu0 0
  %384 = vmatpush.bf16.msra.mxu0 0
  %385 = vmatpush.bf16.msra.mxu0 0
  %386 = vmatpush.bf16.msra.mxu0 0
  %387 = vmatpush.bf16.msra.mxu0 %v300
  %388 = vmatpush.bf16.msra.mxu0 %v298
  %389 = vmatpush.bf16.msra.mxu0 %v296
  %390 = vmatpush.bf16.msra.mxu0 %v294
  %391 = vmatmul.bf16.gmra.mxu0 %v372
  %v392 = vpop.f32.mrf.mxu0
  %v393 = vadd.f32 %v313, %v392
  %v394 = vpop.f32.mrf.mxu0
  %v395 = vadd.f32 %v318, %v394
  %396 = vmatmul.bf16.gmra.mxu0 %v375
  %v397 = vpop.f32.mrf.mxu0
  %v398 = vadd.f32 %v323, %v397
  %v399 = vpop.f32.mrf.mxu0
  %v400 = vadd.f32 %v328, %v399
  %401 = vmatmul.bf16.gmra.mxu0 %v378
  %v402 = vpop.f32.mrf.mxu0
  %v403 = vadd.f32 %v333, %v402
  %v404 = vpop.f32.mrf.mxu0
  %v405 = vadd.f32 %v338, %v404
  %406 = vmatmul.bf16.gmra.mxu0 %v381
  %v407 = vpop.f32.mrf.mxu0
  %v408 = vadd.f32 %v343, %v407
  %v409 = vpop.f32.mrf.mxu0
  %v410 = vadd.f32 %v348, %v409
  %411 = vdwg.mxu0
  %412 = vmatpush.bf16.msra.mxu0 0
  %413 = vmatpush.bf16.msra.mxu0 0
  %414 = vmatpush.bf16.msra.mxu0 0
  %415 = vmatpush.bf16.msra.mxu0 0
  %416 = vmatpush.bf16.msra.mxu0 %v301
  %417 = vmatpush.bf16.msra.mxu0 %v299
  %418 = vmatpush.bf16.msra.mxu0 %v297
  %419 = vmatpush.bf16.msra.mxu0 %v295
  %420 = vmatmul.bf16.gmra.mxu0 %v372
  %v421 = vpop.f32.mrf.mxu0
  %v422 = vadd.f32 %v313, %v421
  %v423 = vpop.f32.mrf.mxu0
  %v424 = vadd.f32 %v318, %v423
  %425 = vmatmul.bf16.gmra.mxu0 %v375
  %v426 = vpop.f32.mrf.mxu0
  %v427 = vadd.f32 %v323, %v426
  %v428 = vpop.f32.mrf.mxu0
  %v429 = vadd.f32 %v328, %v428
  %430 = vmatmul.bf16.gmra.mxu0 %v378
  %v431 = vpop.f32.mrf.mxu0
  %v432 = vadd.f32 %v333, %v431
  %v433 = vpop.f32.mrf.mxu0
  %v434 = vadd.f32 %v338, %v433
  %435 = vmatmul.bf16.gmra.mxu0 %v381
  %v436 = vpop.f32.mrf.mxu0
  %v437 = vadd.f32 %v343, %v436
  %v438 = vpop.f32.mrf.mxu0
  %v439 = vadd.f32 %v348, %v438
  %440 = vdwg.mxu0
  %v441 = vmax.f32 %v393, 0.0
  %v442 = vmax.f32 %v422, 0.0
  %v443 = vmax.f32 %v395, 0.0
  %v444 = vmax.f32 %v424, 0.0
  %v445 = vmax.f32 %v398, 0.0
  %v446 = vmax.f32 %v427, 0.0
  %v447 = vmax.f32 %v400, 0.0
  %v448 = vmax.f32 %v429, 0.0
  %v449 = vmax.f32 %v403, 0.0
  %v450 = vmax.f32 %v432, 0.0
  %v451 = vmax.f32 %v405, 0.0
  %v452 = vmax.f32 %v434, 0.0
  %v453 = vmax.f32 %v408, 0.0
  %v454 = vmax.f32 %v437, 0.0
  %v455 = vmax.f32 %v410, 0.0
  %v456 = vmax.f32 %v439, 0.0
  %v457 = vpack.c.bf16 %v443, %v441
  %v458 = vpack.c.bf16 %v444, %v442
  %v459 = vpack.c.bf16 %v447, %v445
  %v460 = vpack.c.bf16 %v448, %v446
  %v461 = vpack.c.bf16 %v451, %v449
  %v462 = vpack.c.bf16 %v452, %v450
  %v463 = vpack.c.bf16 %v455, %v453
  %v464 = vpack.c.bf16 %v456, %v454
  %v465 = vld [vmem:[%s5] sm:$0xf]
  %v466 = vld [vmem:[%s5 + $0x4] sm:$0xf]
  %v467 = vld [vmem:[%s5 + $0x8] sm:$0xf]
  %v468 = vld [vmem:[%s5 + $0xc] sm:$0xf]
  %v469 = vld [vmem:[%s5 + $0x10] sm:$0xf]
  %v470 = vld [vmem:[%s5 + $0x14] sm:$0xf]
  %v471 = vld [vmem:[%s5 + $0x18] sm:$0xf]
  %v472 = vld [vmem:[%s5 + $0x1c] sm:$0xf]
  %v473 = vld [vmem:[%s6] sm:$0x1]
  %v475 = vperm.slane %v473, 0
  %477 = vxpose.binary.xlu0.c.b16.start [1/16] %v458, %v457, 128
  %478 = vxpose.binary.xlu0.c.b16.cont [2/16] %v460, %v459, 128
  %479 = vxpose.binary.xlu0.c.b16.cont [3/16] %v462, %v461, 128
  %480 = vxpose.binary.xlu0.c.b16.cont [4/16] %v464, %v463, 128
  %481 = vxpose.binary.xlu0.c.b16.cont [5/16] 0, 0, 128
  %482 = vxpose.binary.xlu0.c.b16.cont [6/16] 0, 0, 128
  %483 = vxpose.binary.xlu0.c.b16.cont [7/16] 0, 0, 128
  %484 = vxpose.binary.xlu0.c.b16.end [8/16] 0, 0, 128
  %v485 = vpop.trf.xlu0
  %v486 = vpop.trf.xlu0
  %v487 = vpop.trf.xlu0
  %v488 = vpop.trf.xlu0
  %v489 = vpop.trf.xlu0
  %v490 = vpop.trf.xlu0
  %v491 = vpop.trf.xlu0
  %v492 = vpop.trf.xlu0
  %v493 = vpop.trf.xlu0
  %v494 = vpop.trf.xlu0
  %v495 = vpop.trf.xlu0
  %v496 = vpop.trf.xlu0
  %v497 = vpop.trf.xlu0
  %v498 = vpop.trf.xlu0
  %v499 = vpop.trf.xlu0
  %v500 = vpop.trf.xlu0
  %v509 = vunpack.c.l.b16 %v465
  %v510 = vunpack.c.l.b16 %v466
  %v511 = vunpack.c.l.b16 %v467
  %v512 = vunpack.c.l.b16 %v468
  %v513 = vunpack.c.l.b16 %v469
  %v514 = vunpack.c.l.b16 %v470
  %v515 = vunpack.c.l.b16 %v471
  %v516 = vunpack.c.l.b16 %v472
  %v517 = vpack.c.b16 %v510, %v509
  %v518 = vpack.c.b16 %v512, %v511
  %v519 = vpack.c.b16 %v514, %v513
  %v520 = vpack.c.b16 %v516, %v515
  %v526 = vsel %vm370, %v485, 0
  %v529 = vsel %vm370, %v487, 0
  %v532 = vsel %vm370, %v489, 0
  %v535 = vsel %vm370, %v491, 0
  %v538 = vsel %vm370, %v493, 0
  %v541 = vsel %vm370, %v495, 0
  %v544 = vsel %vm370, %v497, 0
  %v547 = vsel %vm370, %v499, 0
  %v550 = vsel %vm370, %v486, 0
  %v553 = vsel %vm370, %v488, 0
  %v556 = vsel %vm370, %v490, 0
  %v559 = vsel %vm370, %v492, 0
  %v562 = vsel %vm370, %v494, 0
  %v565 = vsel %vm370, %v496, 0
  %v568 = vsel %vm370, %v498, 0
  %v571 = vsel %vm370, %v500, 0
  %573 = vmatpush.bf16.msra.mxu0 0
  %574 = vmatpush.bf16.msra.mxu0 0
  %575 = vmatpush.bf16.msra.mxu0 0
  %576 = vmatpush.bf16.msra.mxu0 0
  %577 = vmatpush.bf16.msra.mxu0 %v520
  %578 = vmatpush.bf16.msra.mxu0 %v519
  %579 = vmatpush.bf16.msra.mxu0 %v518
  %580 = vmatpush.bf16.msra.mxu0 %v517
  %581 = vmatmul.bf16.gmra.mxu0 %v526
  %v582 = vpop.f32.mrf.mxu0
  %v583 = vadd.f32 %v475, %v582
  %v584 = vpop.f32.mrf.mxu0
  %v585 = vadd.f32 %v475, %v584
  %586 = vmatmul.bf16.gmra.mxu0 %v529
  %v587 = vpop.f32.mrf.mxu0
  %v588 = vadd.f32 %v475, %v587
  %v589 = vpop.f32.mrf.mxu0
  %v590 = vadd.f32 %v475, %v589
  %591 = vmatmul.bf16.gmra.mxu0 %v532
  %v592 = vpop.f32.mrf.mxu0
  %v593 = vadd.f32 %v475, %v592
  %v594 = vpop.f32.mrf.mxu0
  %v595 = vadd.f32 %v475, %v594
  %596 = vmatmul.bf16.gmra.mxu0 %v535
  %v597 = vpop.f32.mrf.mxu0
  %v598 = vadd.f32 %v475, %v597
  %v599 = vpop.f32.mrf.mxu0
  %v600 = vadd.f32 %v475, %v599
  %601 = vmatmul.bf16.gmra.mxu0 %v538
  %v602 = vpop.f32.mrf.mxu0
  %v603 = vadd.f32 %v475, %v602
  %v604 = vpop.f32.mrf.mxu0
  %v605 = vadd.f32 %v475, %v604
  %606 = vmatmul.bf16.gmra.mxu0 %v541
  %v607 = vpop.f32.mrf.mxu0
  %v608 = vadd.f32 %v475, %v607
  %v609 = vpop.f32.mrf.mxu0
  %v610 = vadd.f32 %v475, %v609
  %611 = vmatmul.bf16.gmra.mxu0 %v544
  %v612 = vpop.f32.mrf.mxu0
  %v613 = vadd.f32 %v475, %v612
  %v614 = vpop.f32.mrf.mxu0
  %v615 = vadd.f32 %v475, %v614
  %616 = vmatmul.bf16.gmra.mxu0 %v547
  %v617 = vpop.f32.mrf.mxu0
  %v618 = vadd.f32 %v475, %v617
  %v619 = vpop.f32.mrf.mxu0
  %v620 = vadd.f32 %v475, %v619
  %621 = vmatmul.bf16.gmra.mxu0 %v550
  %v622 = vpop.f32.mrf.mxu0
  %v623 = vadd.f32 %v475, %v622
  %v624 = vpop.f32.mrf.mxu0
  %v625 = vadd.f32 %v475, %v624
  %626 = vmatmul.bf16.gmra.mxu0 %v553
  %v627 = vpop.f32.mrf.mxu0
  %v628 = vadd.f32 %v475, %v627
  %v629 = vpop.f32.mrf.mxu0
  %v630 = vadd.f32 %v475, %v629
  %631 = vmatmul.bf16.gmra.mxu0 %v556
  %v632 = vpop.f32.mrf.mxu0
  %v633 = vadd.f32 %v475, %v632
  %v634 = vpop.f32.mrf.mxu0
  %v635 = vadd.f32 %v475, %v634
  %636 = vmatmul.bf16.gmra.mxu0 %v559
  %v637 = vpop.f32.mrf.mxu0
  %v638 = vadd.f32 %v475, %v637
  %v639 = vpop.f32.mrf.mxu0
  %v640 = vadd.f32 %v475, %v639
  %641 = vmatmul.bf16.gmra.mxu0 %v562
  %v642 = vpop.f32.mrf.mxu0
  %v643 = vadd.f32 %v475, %v642
  %v644 = vpop.f32.mrf.mxu0
  %v645 = vadd.f32 %v475, %v644
  %646 = vmatmul.bf16.gmra.mxu0 %v565
  %v647 = vpop.f32.mrf.mxu0
  %v648 = vadd.f32 %v475, %v647
  %v649 = vpop.f32.mrf.mxu0
  %v650 = vadd.f32 %v475, %v649
  %651 = vmatmul.bf16.gmra.mxu0 %v568
  %v652 = vpop.f32.mrf.mxu0
  %v653 = vadd.f32 %v475, %v652
  %v654 = vpop.f32.mrf.mxu0
  %v655 = vadd.f32 %v475, %v654
  %656 = vmatmul.bf16.gmra.mxu0 %v571
  %v657 = vpop.f32.mrf.mxu0
  %v658 = vadd.f32 %v475, %v657
  %v659 = vpop.f32.mrf.mxu0
  %v660 = vadd.f32 %v475, %v659
  %661 = vdwg.mxu0
  %v662 = vtanh.pop %v583
  %v663 = vtanh.pop %v585
  %v664 = vtanh.pop %v588
  %v665 = vtanh.pop %v590
  %v666 = vtanh.pop %v593
  %v667 = vtanh.pop %v595
  %v668 = vtanh.pop %v598
  %v669 = vtanh.pop %v600
  %v670 = vtanh.pop %v603
  %v671 = vtanh.pop %v605
  %v672 = vtanh.pop %v608
  %v673 = vtanh.pop %v610
  %v674 = vtanh.pop %v613
  %v675 = vtanh.pop %v615
  %v676 = vtanh.pop %v618
  %v677 = vtanh.pop %v620
  %v678 = vtanh.pop %v623
  %v679 = vtanh.pop %v625
  %v680 = vtanh.pop %v628
  %v681 = vtanh.pop %v630
  %v682 = vtanh.pop %v633
  %v683 = vtanh.pop %v635
  %v684 = vtanh.pop %v638
  %v685 = vtanh.pop %v640
  %v686 = vtanh.pop %v643
  %v687 = vtanh.pop %v645
  %v688 = vtanh.pop %v648
  %v689 = vtanh.pop %v650
  %v690 = vtanh.pop %v653
  %v691 = vtanh.pop %v655
  %v692 = vtanh.pop %v658
  %v693 = vtanh.pop %v660
  %694 = vst.msk [vmem:[%s7] sm:$0xff] %vm151, %v662
  %695 = vst.msk [vmem:[%s7 + $0x8] sm:$0xff] %vm151, %v663
  %696 = vst.msk [vmem:[%s7 + $0x10] sm:$0xff] %vm151, %v664
  %697 = vst.msk [vmem:[%s7 + $0x18] sm:$0xff] %vm151, %v665
  %698 = vst.msk [vmem:[%s7 + $0x20] sm:$0xff] %vm151, %v666
  %699 = vst.msk [vmem:[%s7 + $0x28] sm:$0xff] %vm151, %v667
  %700 = vst.msk [vmem:[%s7 + $0x30] sm:$0xff] %vm151, %v668
  %701 = vst.msk [vmem:[%s7 + $0x38] sm:$0xff] %vm151, %v669
  %702 = vst.msk [vmem:[%s7 + $0x40] sm:$0xff] %vm151, %v670
  %703 = vst.msk [vmem:[%s7 + $0x48] sm:$0xff] %vm151, %v671
  %704 = vst.msk [vmem:[%s7 + $0x50] sm:$0xff] %vm151, %v672
  %705 = vst.msk [vmem:[%s7 + $0x58] sm:$0xff] %vm151, %v673
  %706 = vst.msk [vmem:[%s7 + $0x60] sm:$0xff] %vm151, %v674
  %707 = vst.msk [vmem:[%s7 + $0x68] sm:$0xff] %vm151, %v675
  %708 = vst.msk [vmem:[%s7 + $0x70] sm:$0xff] %vm151, %v676
  %709 = vst.msk [vmem:[%s7 + $0x78] sm:$0xff] %vm151, %v677
  %710 = vst.msk [vmem:[%s7 + $0x80] sm:$0xff] %vm151, %v678
  %711 = vst.msk [vmem:[%s7 + $0x88] sm:$0xff] %vm151, %v679
  %712 = vst.msk [vmem:[%s7 + $0x90] sm:$0xff] %vm151, %v680
  %713 = vst.msk [vmem:[%s7 + $0x98] sm:$0xff] %vm151, %v681
  %714 = vst.msk [vmem:[%s7 + $0xa0] sm:$0xff] %vm151, %v682
  %715 = vst.msk [vmem:[%s7 + $0xa8] sm:$0xff] %vm151, %v683
  %716 = vst.msk [vmem:[%s7 + $0xb0] sm:$0xff] %vm151, %v684
  %717 = vst.msk [vmem:[%s7 + $0xb8] sm:$0xff] %vm151, %v685
  %718 = vst.msk [vmem:[%s7 + $0xc0] sm:$0xff] %vm151, %v686
  %719 = vst.msk [vmem:[%s7 + $0xc8] sm:$0xff] %vm151, %v687
  %720 = vst.msk [vmem:[%s7 + $0xd0] sm:$0xff] %vm151, %v688
  %721 = vst.msk [vmem:[%s7 + $0xd8] sm:$0xff] %vm151, %v689
  %722 = vst.msk [vmem:[%s7 + $0xe0] sm:$0xff] %vm151, %v690
  %723 = vst.msk [vmem:[%s7 + $0xe8] sm:$0xff] %vm151, %v691
  %724 = vst.msk [vmem:[%s7 + $0xf0] sm:$0xff] %vm151, %v692
  %725 = vst.msk [vmem:[%s7 + $0xf8] sm:$0xff] %vm151, %v693
  // Predicated region
  $region30: #{encoder_forward.1} parent=0 // pred_check
    _
  $region31: #{encoder_forward.1} parent=0 // pred_check_branch
    %727 = sbr.rel (0) target = $region33
  $region32: #{encoder_forward.1} parent=0 // pred_region
    _
  $region33: #{encoder_forward.1} parent=0 // pred_fallthru
    _
  // Predicated region
  $region34: #{encoder_forward.1} parent=0 // pred_check
    _
  $region35: #{encoder_forward.1} parent=0 // pred_check_branch
    %729 = sbr.rel (0) target = $region37
  $region36: #{encoder_forward.1} parent=0 // pred_region
    _
  $region37: #{encoder_forward.1} parent=0 // pred_fallthru
    _

</llo_original>
